<compile_context>
chip_gen: v7x
topology: tpu7x:2x2x1
jax: 0.10.0
libtpu: 0.0.40
codegen_flags: <defaults>
</compile_context>

<pallas_src>
import jax
import jax.numpy as jnp
from jax import lax
from jax.experimental import pallas as pl
from jax.experimental.pallas import tpu as pltpu


def _round_up(x, m):
    return ((x + m - 1) // m) * m


def weighted_mse_loss(theta, theta_gt, weights, *, tile_rows=2048):
    """theta, theta_gt: (B, P) arrays; weights: (1, P). Returns scalar f32."""
    B, P = theta.shape
    assert theta_gt.shape == (B, P) and weights.shape == (1, P)

    lanes = 128
    width = lanes * P  # 384 = lcm(3, 128): lane-dense row width

    # --- lane-dense, copy-free layout --------------------------------------
    # Row-major (B, 3) -> (rows, 384) is a pure metadata reshape when B is a
    # multiple of 128. Ragged batches pay a small zero-pad only; padded rows
    # have diff == 0 and contribute nothing (so no extra masking needed).
    b_pad = _round_up(B, lanes)
    if b_pad != B:
        theta = jnp.pad(theta, ((0, b_pad - B), (0, 0)))
        theta_gt = jnp.pad(theta_gt, ((0, b_pad - B), (0, 0)))
    rows = b_pad // lanes
    x2d = theta.reshape(rows, width)
    y2d = theta_gt.reshape(rows, width)

    # (1, 384) weight row: column c holds weights[c % 3] / B, i.e. the mean
    # over the *real* batch is folded in once, outside the kernel.
    w_row = (jnp.tile(weights.reshape(P).astype(jnp.float32), lanes)
             / jnp.float32(B)).reshape(1, width)

    # --- tiling -------------------------------------------------------------
    tile_rows = max(8, (int(tile_rows) // 8) * 8)  # sublane-aligned tile
    if rows <= tile_rows:
        tile = rows            # single block; full-dim block needs no (8,·) alignment
    else:
        tile = tile_rows
    nt = pl.cdiv(rows, tile)
    rem = rows % tile          # valid rows in the last (partial) block; 0 = exact

    def kernel(x_ref, y_ref, w_ref, out_ref, acc_ref):
        t = pl.program_id(0)
        last = pl.num_programs(0) - 1

        @pl.when(t == 0)
        def _init():
            acc_ref[...] = jnp.zeros_like(acc_ref)

        diff = x_ref[...].astype(jnp.float32) - y_ref[...].astype(jnp.float32)
        sq = diff * diff

        if rem:  # static: the grid has a partial last block -> mask stale rows
            row_id = lax.broadcasted_iota(jnp.int32, sq.shape, 0)
            limit = jnp.where(t == last, rem, sq.shape[0])
            sq = jnp.where(row_id < limit, sq, 0.0)

        # Unweighted per-column partial sums; weights + full reduce happen once.
        acc_ref[...] += jnp.sum(sq, axis=0, keepdims=True)

        @pl.when(t == last)
        def _finalize():
            out_ref[0, 0] = jnp.sum(acc_ref[...] * w_ref[...])

    out = pl.pallas_call(
        kernel,
        out_shape=jax.ShapeDtypeStruct((1, 1), jnp.float32),
        grid_spec=pltpu.PrefetchScalarGridSpec(
            num_scalar_prefetch=0,
            grid=(nt,),
            in_specs=[
                pl.BlockSpec((tile, width), lambda t: (t, 0)),
                pl.BlockSpec((tile, width), lambda t: (t, 0)),
                pl.BlockSpec((1, width), lambda t: (0, 0)),
            ],
            out_specs=pl.BlockSpec((1, 1), lambda t: (0, 0),
                                   memory_space=pltpu.SMEM),
            scratch_shapes=[pltpu.VMEM((1, width), jnp.float32)],
        ),
        compiler_params=pltpu.CompilerParams(
            dimension_semantics=("arbitrary",)),
    )(x2d, y2d, w_row)
    return out[0, 0]


if __name__ == "__main__":
    P = 3
    key = jax.random.PRNGKey(0)
    k1, k2, k3, k4, k5, k6 = jax.random.split(key, 6)
    weights = jnp.array([[1.0, 10000.0, 10000.0]], dtype=jnp.float32)

    def ref_loss(t, g):
        return jnp.sum(weights[0] * jnp.mean((t - g) ** 2, axis=0))

    # Small case matching the module's typical use (a few affine-theta rows).
    B = 8
    theta = jax.random.normal(k1, (B, P), dtype=jnp.float32)
    theta_gt = jax.random.normal(k2, (B, P), dtype=jnp.float32)
    out = jax.block_until_ready(weighted_mse_loss(theta, theta_gt, weights))
    ref = ref_loss(theta, theta_gt)
    assert jnp.allclose(out, ref, rtol=1e-4, atol=1e-4), (out, ref)

    # Ragged batch (not a multiple of 128): exercises the zero-pad path.
    B2 = 300
    theta2 = jax.random.normal(k3, (B2, P), dtype=jnp.float32)
    theta2_gt = jax.random.normal(k4, (B2, P), dtype=jnp.float32)
    out2 = jax.block_until_ready(weighted_mse_loss(theta2, theta2_gt, weights))
    ref2 = ref_loss(theta2, theta2_gt)
    assert jnp.allclose(out2, ref2, rtol=1e-4, atol=1e-4), (out2, ref2)

    # Multi-tile streaming + masked partial last block (tiny tile forces
    # several grid steps so the accumulator/mask machinery is exercised).
    B3 = 3300
    theta3 = jax.random.normal(k5, (B3, P), dtype=jnp.float32)
    theta3_gt = jax.random.normal(k6, (B3, P), dtype=jnp.float32)
    out3 = jax.block_until_ready(
        weighted_mse_loss(theta3, theta3_gt, weights, tile_rows=8))
    ref3 = ref_loss(theta3, theta3_gt)
    assert jnp.allclose(out3, ref3, rtol=1e-4, atol=1e-4), (out3, ref3)

    print("KERNEL_OK")
</pallas_src>

<mosaic_0001>
module attributes {stable_mosaic.version = 11 : i64} {
  func.func @kernel(%arg0: i32, %arg1: memref<1x384xf32, #tpu.memory_space<vmem>>, %arg2: memref<1x384xf32, #tpu.memory_space<vmem>>, %arg3: memref<1x384xf32, #tpu.memory_space<vmem>>, %arg4: memref<1x1xf32, #tpu.memory_space<smem>>, %arg5: memref<1x384xf32, #tpu.memory_space<vmem>>) attributes {dimension_semantics = [#tpu.dimension_semantics<arbitrary>], iteration_bounds = array<i64: 1>, scalar_prefetch = 0 : i64, scratch_operands = 1 : i64, tpu.core_type = #tpu.core_type<tc>, window_params = [{transform_indices = @transform_0, window_bounds = array<i64: 1, 384>}, {transform_indices = @transform_1, window_bounds = array<i64: 1, 384>}, {pipeline_mode = #tpu.pipeline_mode<synchronous>, transform_indices = @transform_2, window_bounds = array<i64: 1, 384>}, {transform_indices = @transform_3, window_bounds = array<i64: 1, 1>}]} {
    %c0_i32 = arith.constant 0 : i32
    %0 = arith.cmpi eq, %arg0, %c0_i32 : i32
    %1 = arith.extui %0 : i1 to i32
    %c0_i32_0 = arith.constant 0 : i32
    %2 = arith.cmpi ne, %1, %c0_i32_0 : i32
    scf.if %2 {
      %cst_10 = arith.constant 0.000000e+00 : f32
      %15 = vector.broadcast %cst_10 : f32 to vector<1x384xf32>
      %c0_11 = arith.constant 0 : index
      %c0_12 = arith.constant 0 : index
      %16 = vector.load %arg5[%c0_11, %c0_12] : memref<1x384xf32, #tpu.memory_space<vmem>>, vector<1x384xf32>
      tpu.vector_store %arg5[%c0_11, %c0_12], %15 {strides = array<i32>} : memref<1x384xf32, #tpu.memory_space<vmem>>, vector<1x384xf32>,
    } else {
    }
    %c0 = arith.constant 0 : index
    %c0_1 = arith.constant 0 : index
    %3 = vector.load %arg1[%c0, %c0_1] : memref<1x384xf32, #tpu.memory_space<vmem>>, vector<1x384xf32>
    %c0_2 = arith.constant 0 : index
    %c0_3 = arith.constant 0 : index
    %4 = vector.load %arg2[%c0_2, %c0_3] : memref<1x384xf32, #tpu.memory_space<vmem>>, vector<1x384xf32>
    %5 = arith.subf %3, %4 : vector<1x384xf32>
    %6 = arith.mulf %5, %5 : vector<1x384xf32>
    %c0_4 = arith.constant 0 : index
    %c0_5 = arith.constant 0 : index
    %7 = vector.load %arg5[%c0_4, %c0_5] : memref<1x384xf32, #tpu.memory_space<vmem>>, vector<1x384xf32>
    %cst = arith.constant dense<0.000000e+00> : vector<384xf32>
    %8 = vector.multi_reduction <add>, %6, %cst [0] : vector<1x384xf32> to vector<384xf32>
    %9 = vector.shape_cast %8 : vector<384xf32> to vector<1x384xf32>
    %10 = arith.addf %7, %9 : vector<1x384xf32>
    %c0_6 = arith.constant 0 : index
    %c0_7 = arith.constant 0 : index
    %11 = vector.load %arg5[%c0_6, %c0_7] : memref<1x384xf32, #tpu.memory_space<vmem>>, vector<1x384xf32>
    tpu.vector_store %arg5[%c0_6, %c0_7], %10 {strides = array<i32>} : memref<1x384xf32, #tpu.memory_space<vmem>>, vector<1x384xf32>,
    %c0_i32_8 = arith.constant 0 : i32
    %12 = arith.cmpi eq, %arg0, %c0_i32_8 : i32
    %13 = arith.extui %12 : i1 to i32
    %c0_i32_9 = arith.constant 0 : i32
    %14 = arith.cmpi ne, %13, %c0_i32_9 : i32
    scf.if %14 {
      %c0_10 = arith.constant 0 : index
      %c0_11 = arith.constant 0 : index
      %15 = vector.load %arg5[%c0_10, %c0_11] : memref<1x384xf32, #tpu.memory_space<vmem>>, vector<1x384xf32>
      %c0_12 = arith.constant 0 : index
      %c0_13 = arith.constant 0 : index
      %16 = vector.load %arg3[%c0_12, %c0_13] : memref<1x384xf32, #tpu.memory_space<vmem>>, vector<1x384xf32>
      %17 = arith.mulf %15, %16 : vector<1x384xf32>
      %18 = vector.shape_cast %17 : vector<1x384xf32> to vector<1x1x384xf32>
      %cst_14 = arith.constant dense<0.000000e+00> : vector<1xf32>
      %19 = vector.multi_reduction <add>, %18, %cst_14 [1, 2] : vector<1x1x384xf32> to vector<1xf32>
      %20 = vector.shape_cast %19 : vector<1xf32> to vector<1x1x1xf32>
      %21 = vector.extract %20[0, 0, 0] : f32 from vector<1x1x1xf32>
      %c0_15 = arith.constant 0 : index
      %c0_16 = arith.constant 0 : index
      %22 = memref.load %arg4[%c0_15, %c0_16] : memref<1x1xf32, #tpu.memory_space<smem>>
      memref.store %21, %arg4[%c0_15, %c0_16] : memref<1x1xf32, #tpu.memory_space<smem>>
    } else {
    }
    return
  }
  func.func @transform_0(%arg0: i32) -> (i32, i32) {
    %c0_i32 = arith.constant 0 : i32
    %c0_i32_0 = arith.constant 0 : i32
    return %arg0, %c0_i32 : i32, i32
  }
  func.func @transform_1(%arg0: i32) -> (i32, i32) {
    %c0_i32 = arith.constant 0 : i32
    %c0_i32_0 = arith.constant 0 : i32
    return %arg0, %c0_i32 : i32, i32
  }
  func.func @transform_2(%arg0: i32) -> (i32, i32) {
    %c0_i32 = arith.constant 0 : i32
    %c0_i32_0 = arith.constant 0 : i32
    %c0_i32_1 = arith.constant 0 : i32
    return %c0_i32, %c0_i32_0 : i32, i32
  }
  func.func @transform_3(%arg0: i32) -> (i32, i32) {
    %c0_i32 = arith.constant 0 : i32
    %c0_i32_0 = arith.constant 0 : i32
    %c0_i32_1 = arith.constant 0 : i32
    return %c0_i32, %c0_i32_0 : i32, i32
  }
}

</mosaic_0001>

<llo_original>
// kernel: tpu_custom_call.1
$region0: #{tpu_custom_call.1}
  #allocation0 [shape = 'u32[]', space=smem, size = 0x4, offset = 0x4, fixed_abs, tag = 'smem constant byte address 0x4 - core index']
  #allocation1 [shape = 'u32[144,128]{1,0:T(1,128)}', space=vmem, size = 0x12000, scoped, tag = 'internal scratch']
  #allocation2 [shape = 'f32[1,384]{1,0:T(1,128)}', space=vmem, size = 0x600, scoped, tag = 'scratch operand']
  %s0 = inlined_call_operand.hbm [shape: f32[1,384], index: 0, kind: input, shape index: {}]
  %s1 = inlined_call_operand.vmem [shape: f32[1,384], index: 1, kind: input, shape index: {}]
  %s2 = inlined_call_operand.vmem [shape: f32[1,384], index: 2, kind: input, shape index: {}]
  %s3 = inlined_call_operand.hbm [shape: f32[1,1], index: 3, kind: output, shape index: {}]
  %s4 = sld [smem:[#allocation0]]
  $region34: #{tpu_custom_call.1} parent=0
    _
  %s6 = ssub.s32 1, %s4
  %s7 = scalar_select 0, %s6, %s4
  $region1: #{tpu_custom_call.1} parent=0
    #allocation3 [shape = 'u8[1536]{0}', space=vmem, size = 0x800, scoped, tag = 'input window, operand 0, single buffered']
    #allocation4 [shape = 's32[1]{0}', space=sflag, size = 0x4, scoped, tag = 'scoped memory for tpu_custom_call.1']
    #allocation5 [shape = 's32[1]{0}', space=sflag, size = 0x4, scoped, tag = 'scoped memory for tpu_custom_call.1']
    #allocation6 [shape = 'u8[512]{0}', space=smem, size = 0x200, scoped, tag = 'output window, operand 0, single buffered']
    %8 = vsyncpa [#allocation4], 0
    %9 = vsyncpa [#allocation5], 0
    // Predicated region
    $region2: #{tpu_custom_call.1} parent=1 // pred_check
      _
    $region3: #{tpu_custom_call.1} parent=1 // pred_check_branch
      %11 = sbr.rel (0) target = $region5
    $region4: #{tpu_custom_call.1} parent=1 // pred_region
      %s13 = ssub.s32 48, 48
      %14 = vsyncadd [#allocation4], %s13
      %s16 = sshll.u32 [#allocation3], 4
      %s17 = int_to_ptr.vmem [resolvable:$true] %s16
      %19 = dma.hbm_to_vmem [thread:$0]  %s0, 48, %s17, [#allocation4]
    $region5: #{tpu_custom_call.1} parent=1 // pred_fallthru
      _
    // Predicated region
    $region6: #{tpu_custom_call.1} parent=1 // pred_check
      _
    $region7: #{tpu_custom_call.1} parent=1 // pred_check_branch
      %21 = sbr.rel (0) target = $region9
    $region8: #{tpu_custom_call.1} parent=1 // pred_region
      _
    $region9: #{tpu_custom_call.1} parent=1 // pred_fallthru
      _
    // Predicated region
    $region10: #{tpu_custom_call.1} parent=1 // pred_check
      _
    $region11: #{tpu_custom_call.1} parent=1 // pred_check_branch
      %23 = sbr.rel (0) target = $region13
    $region12: #{tpu_custom_call.1} parent=1 // pred_region
      _
    $region13: #{tpu_custom_call.1} parent=1 // pred_fallthru
      _
    // Predicated region
    $region14: #{tpu_custom_call.1} parent=1 // pred_check
      _
    $region15: #{tpu_custom_call.1} parent=1 // pred_check_branch
      %25 = sbr.rel (0) target = $region17
    $region16: #{tpu_custom_call.1} parent=1 // pred_region
      %26 = dma.done [#allocation4], 48
    $region17: #{tpu_custom_call.1} parent=1 // pred_fallthru
      _
    %p27 = scmp.eq.s32.totalorder 0, 0
    // Predicated region
    $region18: #{tpu_custom_call.1} parent=1 // pred_check
      %p28 = pneg %p27
    $region19: #{tpu_custom_call.1} parent=1 // pred_check_branch
      %30 = sbr.rel (%p28) target = $region21
    $region20: #{tpu_custom_call.1} parent=1 // pred_region
      %v31 = vlaneseq
      %vm32 = vcmp.ge.s32.totalorder %v31, 0
      %vm33 = vcmp.lt.s32.totalorder %v31, 384
      %vm34 = vmand %vm32, %vm33
      %35 = vst.msk [vmem:[#allocation2] sm:$0x7] %vm34, 0.0
    $region21: #{tpu_custom_call.1} parent=1 // pred_fallthru
      _
    %v36 = vld [vmem:[#allocation3] sm:$0x7]
    %v37 = vld [vmem:[%s1] sm:$0x7]
    %v38 = vsub.f32 %v36, %v37
    %v39 = vmul.f32 %v38, %v38
    %v40 = vld [vmem:[#allocation2] sm:$0x7]
    %v41 = vadd.f32 %v39, 0.0
    %v42 = vadd.f32 %v40, %v41
    %v43 = vlaneseq
    %vm44 = vcmp.ge.s32.totalorder %v43, 0
    %vm45 = vcmp.lt.s32.totalorder %v43, 384
    %vm46 = vmand %vm44, %vm45
    %47 = vst.msk [vmem:[#allocation2] sm:$0x7] %vm46, %v42
    // Predicated region
    $region22: #{tpu_custom_call.1} parent=1 // pred_check
      %p48 = pneg %p27
    $region23: #{tpu_custom_call.1} parent=1 // pred_check_branch
      %50 = sbr.rel (%p48) target = $region25
    $region24: #{tpu_custom_call.1} parent=1 // pred_region
      %v51 = vld [vmem:[#allocation2] sm:$0x7]
      %v52 = vld [vmem:[%s2] sm:$0x7]
      %v53 = vmul.f32 %v51, %v52
      %v55 = vlaneseq
      %v56 = vshrl.u32 %v55, 7
      %v57 = vsub.s32 0, %v56
      %v58 = vrot.slane %v53, %v57
      %v59 = vlaneseq
      %v60 = vshrl.u32 %v59, 7
      %v61 = vsub.s32 1, %v60
      %v62 = vrot.slane %v53, %v61
      %v63 = vlaneseq
      %v64 = vshrl.u32 %v63, 7
      %v65 = vsub.s32 2, %v64
      %v66 = vrot.slane %v53, %v65
      %vm70 = vcmask 1040384
      %v71 = vsel %vm70, %v58, 0.0
      %v72 = vsel %vm70, %v62, 0.0
      %v73 = vadd.f32 %v71, %v72
      %v74 = vsel %vm70, %v66, 0.0
      %v75 = vadd.f32 %v73, %v74
      %76 = vadd.xlane.f32.xlu0 %v75
      %v77 = vpop.xlane.xlu0 %76
      %v78 = vrot.slane %v77, 4
      %v79 = vadd.f32 %v77, %v78
      %v80 = vrot.slane %v79, 2
      %v81 = vadd.f32 %v79, %v80
      %v82 = vrot.slane %v81, 1
      %v83 = vadd.f32 %v81, %v82
      %s84 = vtos %v83
      %s85 = scalar_lea.smem [#allocation6], 0
      %86 = sst [smem:[%s85]] %s84
    $region25: #{tpu_custom_call.1} parent=1 // pred_fallthru
      _
    // Predicated region
    $region26: #{tpu_custom_call.1} parent=1 // pred_check
      _
    $region27: #{tpu_custom_call.1} parent=1 // pred_check_branch
      %88 = sbr.rel (0) target = $region29
    $region28: #{tpu_custom_call.1} parent=1 // pred_region
      %s90 = ssub.s32 16, 16
      %91 = vsyncadd [#allocation5], %s90
      %94 = dma.smem_to_hbm [#allocation6], 16, %s3, [#allocation5]
    $region29: #{tpu_custom_call.1} parent=1 // pred_fallthru
      _
    // Predicated region
    $region30: #{tpu_custom_call.1} parent=1 // pred_check
      _
    $region31: #{tpu_custom_call.1} parent=1 // pred_check_branch
      %96 = sbr.rel (0) target = $region33
    $region32: #{tpu_custom_call.1} parent=1 // pred_region
      %97 = dma.done [#allocation5], 16
    $region33: #{tpu_custom_call.1} parent=1 // pred_fallthru
      _
    %98 = sfence
    %99 = vsyncpa [#allocation4], 1
    %100 = vsyncpa [#allocation5], 1

</llo_original>
